<compile_context>
chip_gen: v7x
topology: tpu7x:2x2x1
jax: 0.10.0
libtpu: 0.0.40
codegen_flags: <defaults>
</compile_context>

<pallas_src>
import jax
import jax.numpy as jnp
from jax.experimental import pallas as pl
from jax.experimental.pallas import tpu as pltpu


def _round_up(x: int, m: int) -> int:
    return (x + m - 1) // m * m


def generator_mlp_kernel(z_ref, w1_ref, b1_ref, w2_ref, b2_ref, w3_ref, b3_ref, o_ref):
    # Layer 1: Linear(latent -> 2*latent, lane-padded) + ReLU  (f32 accumulate)
    h1 = jnp.dot(z_ref[...], w1_ref[...], preferred_element_type=jnp.float32)
    h1 = jnp.maximum(h1 + b1_ref[...], 0.0)
    # Cast activations back to the weight dtype so the next MXU op runs at full rate
    # when bf16 operands are used (no-op for f32).
    h1 = h1.astype(w2_ref.dtype)

    # Layer 2: Linear(-> 128) + ReLU
    h2 = jnp.dot(h1, w2_ref[...], preferred_element_type=jnp.float32)
    h2 = jnp.maximum(h2 + b2_ref[...], 0.0)
    h2 = h2.astype(w3_ref.dtype)

    # Layer 3: Linear(-> feature_dim, lane-padded), no activation
    out = jnp.dot(h2, w3_ref[...], preferred_element_type=jnp.float32) + b3_ref[...]
    o_ref[...] = out.astype(o_ref.dtype)


def generator_forward(z, params, *, batch_tile=512, compute_dtype=None):
    """Fused Generator.forward.

    z: (B, latent_dim) float32.
    params: (w1, b1, w2, b2, w3, b3) with w_k of shape (in, out), b_k of shape (1, out).
    batch_tile: target rows per grid step (clamped to the batch; multiple of 8).
    compute_dtype: optional matmul operand dtype (e.g. jnp.bfloat16 on v6e/v7x).
    """
    w1, b1, w2, b2, w3, b3 = params
    B, latent_dim = z.shape
    h1_dim = w1.shape[1]          # 2 * latent_dim
    h2_dim = w2.shape[1]          # 128
    feature_dim = w3.shape[1]
    out_dtype = z.dtype

    # ---- Lane padding: hidden / output feature dims -> multiples of 128 -------------
    LANE = 128
    h1_p = _round_up(h1_dim, LANE)
    h2_p = _round_up(h2_dim, LANE)
    f_p = _round_up(feature_dim, LANE)

    def pad2(a, rows, cols):
        return jnp.pad(a, ((0, rows - a.shape[0]), (0, cols - a.shape[1])))

    w1p, b1p = pad2(w1, latent_dim, h1_p), pad2(b1, 1, h1_p)
    w2p, b2p = pad2(w2, h1_p, h2_p), pad2(b2, 1, h2_p)
    w3p, b3p = pad2(w3, h2_p, f_p), pad2(b3, 1, f_p)

    # ---- Batch tiling: big tiles, pad B up to a tile multiple ------------------------
    SUBLANE = 8
    tile = min(int(batch_tile), _round_up(B, SUBLANE))
    tile = _round_up(tile, SUBLANE)
    B_p = _round_up(B, tile)
    zp = jnp.pad(z, ((0, B_p - B), (0, 0)))

    if compute_dtype is not None:
        # bf16 (or other) operands for the MXU; biases stay f32 and are added to the
        # f32 accumulator inside the kernel, keeping the VPU path f32 (v5e-friendly).
        zp = zp.astype(compute_dtype)
        w1p = w1p.astype(compute_dtype)
        w2p = w2p.astype(compute_dtype)
        w3p = w3p.astype(compute_dtype)

    grid = (B_p // tile,)

    # Advisory cost estimate so XLA schedules surrounding ops sensibly.
    flops = 2 * B_p * (latent_dim * h1_p + h1_p * h2_p + h2_p * f_p)
    bytes_accessed = int(
        sum(int(a.size) * a.dtype.itemsize for a in (zp, w1p, b1p, w2p, b2p, w3p, b3p))
        + B_p * f_p * jnp.dtype(out_dtype).itemsize
    )
    cost = pl.CostEstimate(flops=int(flops), transcendentals=0,
                           bytes_accessed=bytes_accessed)

    # Weights/biases are tiny (~150 KiB padded f32), so the default 2-deep pipelining
    # on their constant-index BlockSpecs costs almost nothing; if the model grows,
    # switch them to pipeline_mode=pl.Buffered(1) or persistent VMEM scratch.
    # Per-step VMEM (Z tile + out tile + weights, double-buffered) is well under 1 MiB
    # at tile=512, so no vmem_limit_bytes override is needed on any generation.
    out_padded = pl.pallas_call(
        generator_mlp_kernel,
        out_shape=jax.ShapeDtypeStruct((B_p, f_p), out_dtype),
        grid=grid,
        in_specs=[
            pl.BlockSpec((tile, latent_dim), lambda i: (i, 0)),   # Z tile (streamed)
            pl.BlockSpec((latent_dim, h1_p), lambda i: (0, 0)),   # W1 (resident)
            pl.BlockSpec((1, h1_p), lambda i: (0, 0)),            # b1
            pl.BlockSpec((h1_p, h2_p), lambda i: (0, 0)),         # W2
            pl.BlockSpec((1, h2_p), lambda i: (0, 0)),            # b2
            pl.BlockSpec((h2_p, f_p), lambda i: (0, 0)),          # W3
            pl.BlockSpec((1, f_p), lambda i: (0, 0)),             # b3
        ],
        out_specs=pl.BlockSpec((tile, f_p), lambda i: (i, 0)),    # lane-dense output
        compiler_params=pltpu.CompilerParams(
            dimension_semantics=("parallel",),                    # megacore-shardable
        ),
        cost_estimate=cost,
    )(zp, w1p, b1p, w2p, b2p, w3p, b3p)

    return out_padded[:B, :feature_dim]


def init_generator_params(key, latent_dim, feature_dim, dtype=jnp.float32):
    """Mimics PyTorch nn.Linear default init (U[-1/sqrt(in), 1/sqrt(in)]).
    Weights stored as (in, out) = PyTorch weight transposed; biases as (1, out)."""
    dims = [(latent_dim, 2 * latent_dim), (2 * latent_dim, 128), (128, feature_dim)]
    params = []
    keys = jax.random.split(key, 2 * len(dims))
    for li, (fan_in, fan_out) in enumerate(dims):
        bound = 1.0 / (fan_in ** 0.5)
        w = jax.random.uniform(keys[2 * li], (fan_in, fan_out),
                               minval=-bound, maxval=bound, dtype=dtype)
        b = jax.random.uniform(keys[2 * li + 1], (1, fan_out),
                               minval=-bound, maxval=bound, dtype=dtype)
        params += [w, b]
    return tuple(params)


def generator_reference(z, params):
    w1, b1, w2, b2, w3, b3 = params
    h = jnp.maximum(z @ w1 + b1, 0.0)
    h = jnp.maximum(h @ w2 + b2, 0.0)
    return h @ w3 + b3


if __name__ == "__main__":
    latent_dim = 32
    feature_dim = 64
    batch = 16

    key = jax.random.PRNGKey(0)
    kz, kp = jax.random.split(key)
    Z = jax.random.normal(kz, (batch, latent_dim), dtype=jnp.float32)
    params = init_generator_params(kp, latent_dim, feature_dim)

    ref = generator_reference(Z, params)

    # f32 path (tight check). Small batch -> single grid step (whole batch in one tile).
    out = jax.block_until_ready(generator_forward(Z, params))
    assert out.shape == (batch, feature_dim)
    assert jnp.allclose(out, ref, atol=1e-5, rtol=1e-5), "f32 mismatch vs. JAX reference"

    # bf16-operand path (MXU throughput on v6e/v7x); f32 accumulation, looser tolerance.
    out_bf16 = jax.block_until_ready(
        generator_forward(Z, params, compute_dtype=jnp.bfloat16))
    assert out_bf16.shape == (batch, feature_dim)
    assert jnp.allclose(out_bf16, ref, atol=1e-1, rtol=1e-1), "bf16 mismatch vs. JAX reference"

    print("KERNEL_OK")
</pallas_src>

<mosaic_0001>
module attributes {stable_mosaic.version = 11 : i64} {
  func.func @generator_mlp_kernel(%arg0: i32, %arg1: memref<16x32xf32, #tpu.memory_space<vmem>>, %arg2: memref<32x128xf32, #tpu.memory_space<vmem>>, %arg3: memref<1x128xf32, #tpu.memory_space<vmem>>, %arg4: memref<128x128xf32, #tpu.memory_space<vmem>>, %arg5: memref<1x128xf32, #tpu.memory_space<vmem>>, %arg6: memref<128x128xf32, #tpu.memory_space<vmem>>, %arg7: memref<1x128xf32, #tpu.memory_space<vmem>>, %arg8: memref<16x128xf32, #tpu.memory_space<vmem>>) attributes {dimension_semantics = [#tpu.dimension_semantics<parallel>], iteration_bounds = array<i64: 1>, scalar_prefetch = 0 : i64, scratch_operands = 0 : i64, tpu.core_type = #tpu.core_type<tc>, window_params = [{transform_indices = @transform_0, window_bounds = array<i64: 16, 32>}, {pipeline_mode = #tpu.pipeline_mode<synchronous>, transform_indices = @transform_1, window_bounds = array<i64: 32, 128>}, {pipeline_mode = #tpu.pipeline_mode<synchronous>, transform_indices = @transform_2, window_bounds = array<i64: 1, 128>}, {pipeline_mode = #tpu.pipeline_mode<synchronous>, transform_indices = @transform_3, window_bounds = array<i64: 128, 128>}, {pipeline_mode = #tpu.pipeline_mode<synchronous>, transform_indices = @transform_4, window_bounds = array<i64: 1, 128>}, {pipeline_mode = #tpu.pipeline_mode<synchronous>, transform_indices = @transform_5, window_bounds = array<i64: 128, 128>}, {pipeline_mode = #tpu.pipeline_mode<synchronous>, transform_indices = @transform_6, window_bounds = array<i64: 1, 128>}, {transform_indices = @transform_7, window_bounds = array<i64: 16, 128>}]} {
    %c0 = arith.constant 0 : index
    %c0_0 = arith.constant 0 : index
    %0 = vector.load %arg1[%c0, %c0_0] : memref<16x32xf32, #tpu.memory_space<vmem>>, vector<16x32xf32>
    %c0_1 = arith.constant 0 : index
    %c0_2 = arith.constant 0 : index
    %1 = vector.load %arg2[%c0_1, %c0_2] : memref<32x128xf32, #tpu.memory_space<vmem>>, vector<32x128xf32>
    %cst = arith.constant dense<0.000000e+00> : vector<16x128xf32>
    %2 = tpu.matmul %0, %1, %cst {dimension_numbers = #tpu.dot_dimension_numbers<[1], [0], [0], [1], [0, 0, 1, 1], [], []>} : vector<16x32xf32>, vector<32x128xf32>, vector<16x128xf32> -> vector<16x128xf32>
    %c0_3 = arith.constant 0 : index
    %c0_4 = arith.constant 0 : index
    %3 = vector.load %arg3[%c0_3, %c0_4] : memref<1x128xf32, #tpu.memory_space<vmem>>, vector<1x128xf32>
    %4 = vector.broadcast %3 : vector<1x128xf32> to vector<16x128xf32>
    %5 = arith.addf %2, %4 : vector<16x128xf32>
    %cst_5 = arith.constant 0.000000e+00 : f32
    %6 = vector.broadcast %cst_5 : f32 to vector<16x128xf32>
    %7 = arith.maximumf %5, %6 : vector<16x128xf32>
    %c0_6 = arith.constant 0 : index
    %c0_7 = arith.constant 0 : index
    %8 = vector.load %arg4[%c0_6, %c0_7] : memref<128x128xf32, #tpu.memory_space<vmem>>, vector<128x128xf32>
    %cst_8 = arith.constant dense<0.000000e+00> : vector<16x128xf32>
    %9 = tpu.matmul %7, %8, %cst_8 {dimension_numbers = #tpu.dot_dimension_numbers<[1], [0], [0], [1], [0, 0, 1, 1], [], []>} : vector<16x128xf32>, vector<128x128xf32>, vector<16x128xf32> -> vector<16x128xf32>
    %c0_9 = arith.constant 0 : index
    %c0_10 = arith.constant 0 : index
    %10 = vector.load %arg5[%c0_9, %c0_10] : memref<1x128xf32, #tpu.memory_space<vmem>>, vector<1x128xf32>
    %11 = vector.broadcast %10 : vector<1x128xf32> to vector<16x128xf32>
    %12 = arith.addf %9, %11 : vector<16x128xf32>
    %cst_11 = arith.constant 0.000000e+00 : f32
    %13 = vector.broadcast %cst_11 : f32 to vector<16x128xf32>
    %14 = arith.maximumf %12, %13 : vector<16x128xf32>
    %c0_12 = arith.constant 0 : index
    %c0_13 = arith.constant 0 : index
    %15 = vector.load %arg6[%c0_12, %c0_13] : memref<128x128xf32, #tpu.memory_space<vmem>>, vector<128x128xf32>
    %cst_14 = arith.constant dense<0.000000e+00> : vector<16x128xf32>
    %16 = tpu.matmul %14, %15, %cst_14 {dimension_numbers = #tpu.dot_dimension_numbers<[1], [0], [0], [1], [0, 0, 1, 1], [], []>} : vector<16x128xf32>, vector<128x128xf32>, vector<16x128xf32> -> vector<16x128xf32>
    %c0_15 = arith.constant 0 : index
    %c0_16 = arith.constant 0 : index
    %17 = vector.load %arg7[%c0_15, %c0_16] : memref<1x128xf32, #tpu.memory_space<vmem>>, vector<1x128xf32>
    %18 = vector.broadcast %17 : vector<1x128xf32> to vector<16x128xf32>
    %19 = arith.addf %16, %18 : vector<16x128xf32>
    %c0_17 = arith.constant 0 : index
    %c0_18 = arith.constant 0 : index
    %20 = vector.load %arg8[%c0_17, %c0_18] : memref<16x128xf32, #tpu.memory_space<vmem>>, vector<16x128xf32>
    tpu.vector_store %arg8[%c0_17, %c0_18], %19 {strides = array<i32>} : memref<16x128xf32, #tpu.memory_space<vmem>>, vector<16x128xf32>,
    return
  }
  func.func @transform_0(%arg0: i32) -> (i32, i32) {
    %c0_i32 = arith.constant 0 : i32
    %c0_i32_0 = arith.constant 0 : i32
    return %arg0, %c0_i32 : i32, i32
  }
  func.func @transform_1(%arg0: i32) -> (i32, i32) {
    %c0_i32 = arith.constant 0 : i32
    %c0_i32_0 = arith.constant 0 : i32
    %c0_i32_1 = arith.constant 0 : i32
    return %c0_i32, %c0_i32_0 : i32, i32
  }
  func.func @transform_2(%arg0: i32) -> (i32, i32) {
    %c0_i32 = arith.constant 0 : i32
    %c0_i32_0 = arith.constant 0 : i32
    %c0_i32_1 = arith.constant 0 : i32
    return %c0_i32, %c0_i32_0 : i32, i32
  }
  func.func @transform_3(%arg0: i32) -> (i32, i32) {
    %c0_i32 = arith.constant 0 : i32
    %c0_i32_0 = arith.constant 0 : i32
    %c0_i32_1 = arith.constant 0 : i32
    return %c0_i32, %c0_i32_0 : i32, i32
  }
  func.func @transform_4(%arg0: i32) -> (i32, i32) {
    %c0_i32 = arith.constant 0 : i32
    %c0_i32_0 = arith.constant 0 : i32
    %c0_i32_1 = arith.constant 0 : i32
    return %c0_i32, %c0_i32_0 : i32, i32
  }
  func.func @transform_5(%arg0: i32) -> (i32, i32) {
    %c0_i32 = arith.constant 0 : i32
    %c0_i32_0 = arith.constant 0 : i32
    %c0_i32_1 = arith.constant 0 : i32
    return %c0_i32, %c0_i32_0 : i32, i32
  }
  func.func @transform_6(%arg0: i32) -> (i32, i32) {
    %c0_i32 = arith.constant 0 : i32
    %c0_i32_0 = arith.constant 0 : i32
    %c0_i32_1 = arith.constant 0 : i32
    return %c0_i32, %c0_i32_0 : i32, i32
  }
  func.func @transform_7(%arg0: i32) -> (i32, i32) {
    %c0_i32 = arith.constant 0 : i32
    %c0_i32_0 = arith.constant 0 : i32
    return %arg0, %c0_i32 : i32, i32
  }
}

</mosaic_0001>

<llo_original>
// kernel: tpu_custom_call.1
$region0: #{tpu_custom_call.1}
  #allocation0 [shape = 'u32[]', space=smem, size = 0x4, offset = 0x4, fixed_abs, tag = 'smem constant byte address 0x4 - core index']
  #allocation1 [shape = 'u32[144,128]{1,0:T(1,128)}', space=vmem, size = 0x12000, scoped, tag = 'internal scratch']
  %s0 = inlined_call_operand.hbm [shape: f32[16,32], index: 0, kind: input, shape index: {}]
  %s1 = inlined_call_operand.hbm [shape: f32[32,128], index: 1, kind: input, shape index: {}]
  %s2 = inlined_call_operand.vmem [shape: f32[1,128], index: 2, kind: input, shape index: {}]
  %s3 = inlined_call_operand.hbm [shape: f32[128,128], index: 3, kind: input, shape index: {}]
  %s4 = inlined_call_operand.vmem [shape: f32[1,128], index: 4, kind: input, shape index: {}]
  %s5 = inlined_call_operand.hbm [shape: f32[128,128], index: 5, kind: input, shape index: {}]
  %s6 = inlined_call_operand.vmem [shape: f32[1,128], index: 6, kind: input, shape index: {}]
  %s7 = inlined_call_operand.hbm [shape: f32[16,128], index: 7, kind: output, shape index: {}]
  %s8 = sld [smem:[#allocation0]]
  $region54: #{tpu_custom_call.1} parent=0
    _
  %s10 = ssub.s32 1, %s8
  %s11 = scalar_select 0, %s10, %s8
  $region1: #{tpu_custom_call.1} parent=0
    #allocation2 [shape = 'u8[8192]{0}', space=vmem, size = 0x2000, scoped, tag = 'input window, operand 0, single buffered']
    #allocation3 [shape = 's32[1]{0}', space=sflag, size = 0x4, scoped, tag = 'scoped memory for tpu_custom_call.1']
    #allocation4 [shape = 's32[1]{0}', space=sflag, size = 0x4, scoped, tag = 'scoped memory for tpu_custom_call.1']
    #allocation5 [shape = 'u8[16384]{0}', space=vmem, size = 0x4000, scoped, tag = 'input window, operand 1, single buffered']
    #allocation6 [shape = 's32[1]{0}', space=sflag, size = 0x4, scoped, tag = 'scoped memory for tpu_custom_call.1']
    #allocation7 [shape = 'u8[65536]{0}', space=vmem, size = 0x10000, scoped, tag = 'input window, operand 3, single buffered']
    #allocation8 [shape = 'u8[65536]{0}', space=vmem, size = 0x10000, scoped, tag = 'input window, operand 5, single buffered']
    #allocation9 [shape = 's32[1]{0}', space=sflag, size = 0x4, scoped, tag = 'scoped memory for tpu_custom_call.1']
    #allocation10 [shape = 'u8[8192]{0}', space=vmem, size = 0x2000, scoped, tag = 'output window, operand 0, single buffered']
    %12 = vsyncpa [#allocation3], 0
    %13 = vsyncpa [#allocation6], 0
    %14 = vsyncpa [#allocation9], 0
    %15 = vsyncpa [#allocation4], 0
    // Predicated region
    $region2: #{tpu_custom_call.1} parent=1 // pred_check
      _
    $region3: #{tpu_custom_call.1} parent=1 // pred_check_branch
      %17 = sbr.rel (0) target = $region5
    $region4: #{tpu_custom_call.1} parent=1 // pred_region
      %s19 = ssub.s32 256, 256
      %20 = vsyncadd [#allocation3], %s19
      %s21 = sshll.u32 [#allocation2], 4
      %s22 = int_to_ptr.vmem [resolvable:$true] %s21
      %27 = dma.hbm_to_vmem [thread:$0]  %s0, 256, %s22, [#allocation3], 128, 128, 8
    $region5: #{tpu_custom_call.1} parent=1 // pred_fallthru
      _
    // Predicated region
    $region6: #{tpu_custom_call.1} parent=1 // pred_check
      _
    $region7: #{tpu_custom_call.1} parent=1 // pred_check_branch
      %29 = sbr.rel (0) target = $region9
    $region8: #{tpu_custom_call.1} parent=1 // pred_region
      %s31 = ssub.s32 512, 512
      %32 = vsyncadd [#allocation6], %s31
      %s33 = sshll.u32 [#allocation5], 4
      %s34 = int_to_ptr.vmem [resolvable:$true] %s33
      %39 = dma.hbm_to_vmem [thread:$0]  %s1, 512, %s34, [#allocation6], 128, 128, 8
    $region9: #{tpu_custom_call.1} parent=1 // pred_fallthru
      _
    // Predicated region
    $region10: #{tpu_custom_call.1} parent=1 // pred_check
      _
    $region11: #{tpu_custom_call.1} parent=1 // pred_check_branch
      %41 = sbr.rel (0) target = $region13
    $region12: #{tpu_custom_call.1} parent=1 // pred_region
      _
    $region13: #{tpu_custom_call.1} parent=1 // pred_fallthru
      _
    // Predicated region
    $region14: #{tpu_custom_call.1} parent=1 // pred_check
      _
    $region15: #{tpu_custom_call.1} parent=1 // pred_check_branch
      %43 = sbr.rel (0) target = $region17
    $region16: #{tpu_custom_call.1} parent=1 // pred_region
      %s45 = ssub.s32 2048, 2048
      %46 = vsyncadd [#allocation6], %s45
      %s47 = sshll.u32 [#allocation7], 4
      %s48 = int_to_ptr.vmem [resolvable:$true] %s47
      %53 = dma.hbm_to_vmem [thread:$0]  %s3, 2048, %s48, [#allocation6], 128, 128, 8
    $region17: #{tpu_custom_call.1} parent=1 // pred_fallthru
      _
    // Predicated region
    $region18: #{tpu_custom_call.1} parent=1 // pred_check
      _
    $region19: #{tpu_custom_call.1} parent=1 // pred_check_branch
      %55 = sbr.rel (0) target = $region21
    $region20: #{tpu_custom_call.1} parent=1 // pred_region
      _
    $region21: #{tpu_custom_call.1} parent=1 // pred_fallthru
      _
    // Predicated region
    $region22: #{tpu_custom_call.1} parent=1 // pred_check
      _
    $region23: #{tpu_custom_call.1} parent=1 // pred_check_branch
      %57 = sbr.rel (0) target = $region25
    $region24: #{tpu_custom_call.1} parent=1 // pred_region
      %s59 = ssub.s32 2048, 2048
      %60 = vsyncadd [#allocation9], %s59
      %s61 = sshll.u32 [#allocation8], 4
      %s62 = int_to_ptr.vmem [resolvable:$true] %s61
      %67 = dma.hbm_to_vmem [thread:$0]  %s5, 2048, %s62, [#allocation9], 128, 128, 8
    $region25: #{tpu_custom_call.1} parent=1 // pred_fallthru
      _
    // Predicated region
    $region26: #{tpu_custom_call.1} parent=1 // pred_check
      _
    $region27: #{tpu_custom_call.1} parent=1 // pred_check_branch
      %69 = sbr.rel (0) target = $region29
    $region28: #{tpu_custom_call.1} parent=1 // pred_region
      _
    $region29: #{tpu_custom_call.1} parent=1 // pred_fallthru
      _
    // Predicated region
    $region30: #{tpu_custom_call.1} parent=1 // pred_check
      _
    $region31: #{tpu_custom_call.1} parent=1 // pred_check_branch
      %71 = sbr.rel (0) target = $region33
    $region32: #{tpu_custom_call.1} parent=1 // pred_region
      %72 = dma.done [#allocation3], 256
    $region33: #{tpu_custom_call.1} parent=1 // pred_fallthru
      _
    // Predicated region
    $region34: #{tpu_custom_call.1} parent=1 // pred_check
      _
    $region35: #{tpu_custom_call.1} parent=1 // pred_check_branch
      %74 = sbr.rel (0) target = $region37
    $region36: #{tpu_custom_call.1} parent=1 // pred_region
      %75 = dma.done [#allocation6], 512
    $region37: #{tpu_custom_call.1} parent=1 // pred_fallthru
      _
    // Predicated region
    $region38: #{tpu_custom_call.1} parent=1 // pred_check
      _
    $region39: #{tpu_custom_call.1} parent=1 // pred_check_branch
      %77 = sbr.rel (0) target = $region41
    $region40: #{tpu_custom_call.1} parent=1 // pred_region
      %78 = dma.done [#allocation6], 2048
    $region41: #{tpu_custom_call.1} parent=1 // pred_fallthru
      _
    // Predicated region
    $region42: #{tpu_custom_call.1} parent=1 // pred_check
      _
    $region43: #{tpu_custom_call.1} parent=1 // pred_check_branch
      %80 = sbr.rel (0) target = $region45
    $region44: #{tpu_custom_call.1} parent=1 // pred_region
      %81 = dma.done [#allocation9], 2048
    $region45: #{tpu_custom_call.1} parent=1 // pred_fallthru
      _
    %v82 = vld [vmem:[#allocation2] sm:$0xff]
    %v83 = vld [vmem:[#allocation2 + $0x8] sm:$0xff]
    %v84 = vld [vmem:[#allocation5] sm:$0xff]
    %v85 = vld [vmem:[#allocation5 + $0x8] sm:$0xff]
    %v86 = vld [vmem:[#allocation5 + $0x10] sm:$0xff]
    %v87 = vld [vmem:[#allocation5 + $0x18] sm:$0xff]
    %v88 = vld [vmem:[%s2] sm:$0x1]
    %v90 = vlaneseq
    %v91 = vshrl.u32 %v90, 7
    %v92 = vsub.s32 0, %v91
    %v93 = vrot.slane %v88, %v92
    %vm95 = vcmask 261120
    %v97 = vsel %vm95, %v82, 0
    %v100 = vsel %vm95, %v83, 0
    %102 = vmatprep.subr.mxu0 0.0
    %103 = vmatpush1.msra.mxu0 %v84
    %104 = vmatprep.subr.mxu0 0.0
    %105 = vmatpush1.msra.mxu0 %v85
    %106 = vmatprep.subr.mxu0 0.0
    %107 = vmatpush1.msra.mxu0 %v86
    %108 = vmatprep.subr.mxu0 0.0
    %109 = vmatpush1.msra.mxu0 %v87
    %110 = vmatprep.subr.mxu0 0.0
    %111 = vmatpush1.msra.mxu0 0.0
    %112 = vmatprep.subr.mxu0 0.0
    %113 = vmatpush1.msra.mxu0 0.0
    %114 = vmatprep.subr.mxu0 0.0
    %115 = vmatpush1.msra.mxu0 0.0
    %116 = vmatprep.subr.mxu0 0.0
    %117 = vmatpush1.msra.mxu0 0.0
    %118 = vmatprep.subr.mxu0 0.0
    %119 = vmatpush1.msra.mxu0 0.0
    %120 = vmatprep.subr.mxu0 0.0
    %121 = vmatpush1.msra.mxu0 0.0
    %122 = vmatprep.subr.mxu0 0.0
    %123 = vmatpush1.msra.mxu0 0.0
    %124 = vmatprep.subr.mxu0 0.0
    %125 = vmatpush1.msra.mxu0 0.0
    %126 = vmatprep.subr.mxu0 0.0
    %127 = vmatpush1.msra.mxu0 0.0
    %128 = vmatprep.subr.mxu0 0.0
    %129 = vmatpush1.msra.mxu0 0.0
    %130 = vmatprep.subr.mxu0 0.0
    %131 = vmatpush1.msra.mxu0 0.0
    %132 = vmatprep.subr.mxu0 0.0
    %133 = vmatpush1.msra.mxu0 0.0
    %134 = vmatprep.subr.mxu0 0.0
    %135 = vmatpush1.msra.mxu0 0.0
    %136 = vmatprep.subr.mxu0 0.0
    %137 = vmatpush1.msra.mxu0 0.0
    %138 = vmatprep.subr.mxu0 0.0
    %139 = vmatpush1.msra.mxu0 0.0
    %140 = vmatprep.subr.mxu0 0.0
    %141 = vmatpush1.msra.mxu0 0.0
    %142 = vmatprep.subr.mxu0 0.0
    %143 = vmatpush1.msra.mxu0 0.0
    %144 = vmatprep.subr.mxu0 0.0
    %145 = vmatpush1.msra.mxu0 0.0
    %146 = vmatprep.subr.mxu0 0.0
    %147 = vmatpush1.msra.mxu0 0.0
    %148 = vmatprep.subr.mxu0 0.0
    %149 = vmatpush1.msra.mxu0 0.0
    %150 = vmatprep.subr.mxu0 0.0
    %151 = vmatpush1.msra.mxu0 0.0
    %152 = vmatprep.subr.mxu0 0.0
    %153 = vmatpush1.msra.mxu0 0.0
    %154 = vmatprep.subr.mxu0 0.0
    %155 = vmatpush1.msra.mxu0 0.0
    %156 = vmatprep.subr.mxu0 0.0
    %157 = vmatpush1.msra.mxu0 0.0
    %158 = vmatprep.subr.mxu0 0.0
    %159 = vmatpush1.msra.mxu0 0.0
    %160 = vmatprep.subr.mxu0 0.0
    %161 = vmatpush1.msra.mxu0 0.0
    %162 = vmatprep.subr.mxu0 0.0
    %163 = vmatpush1.msra.mxu0 0.0
    %164 = vmatprep.subr.mxu0 0.0
    %165 = vmatpush1.msra.mxu0 0.0
    %166 = vmatprep.mubr.f32.mxu0 0.0
    %167 = vmatmul.mubr.f32.gmra.mrb[0].mxu0 %v97
    %v168 = vpop.f32.mrb[0].mxu0
    %v169 = vadd.f32 %v93, %v168
    %v170 = vpop.f32.mrb[0].mxu0
    %171 = vmatprep.mubr.f32.mxu0 0.0
    %172 = vmatmul.mubr.f32.gmra.mrb[0].mxu0 %v100
    %v173 = vpop.f32.mrb[0].mxu0
    %v174 = vadd.f32 %v93, %v173
    %v175 = vpop.f32.mrb[0].mxu0
    %176 = vdwg.mxu0
    %v177 = vmax.f32 %v169, 0.0
    %v178 = vmax.f32 %v174, 0.0
    %v179 = vld [vmem:[#allocation7] sm:$0xff]
    %v180 = vld [vmem:[#allocation7 + $0x8] sm:$0xff]
    %v181 = vld [vmem:[#allocation7 + $0x10] sm:$0xff]
    %v182 = vld [vmem:[#allocation7 + $0x18] sm:$0xff]
    %v183 = vld [vmem:[#allocation7 + $0x20] sm:$0xff]
    %v184 = vld [vmem:[#allocation7 + $0x28] sm:$0xff]
    %v185 = vld [vmem:[#allocation7 + $0x30] sm:$0xff]
    %v186 = vld [vmem:[#allocation7 + $0x38] sm:$0xff]
    %v187 = vld [vmem:[#allocation7 + $0x40] sm:$0xff]
    %v188 = vld [vmem:[#allocation7 + $0x48] sm:$0xff]
    %v189 = vld [vmem:[#allocation7 + $0x50] sm:$0xff]
    %v190 = vld [vmem:[#allocation7 + $0x58] sm:$0xff]
    %v191 = vld [vmem:[#allocation7 + $0x60] sm:$0xff]
    %v192 = vld [vmem:[#allocation7 + $0x68] sm:$0xff]
    %v193 = vld [vmem:[#allocation7 + $0x70] sm:$0xff]
    %v194 = vld [vmem:[#allocation7 + $0x78] sm:$0xff]
    %v195 = vld [vmem:[%s4] sm:$0x1]
    %v197 = vlaneseq
    %v198 = vshrl.u32 %v197, 7
    %v199 = vsub.s32 0, %v198
    %v200 = vrot.slane %v195, %v199
    %202 = vmatprep.subr.mxu0 0.0
    %203 = vmatpush1.msra.mxu0 %v179
    %204 = vmatprep.subr.mxu0 0.0
    %205 = vmatpush1.msra.mxu0 %v180
    %206 = vmatprep.subr.mxu0 0.0
    %207 = vmatpush1.msra.mxu0 %v181
    %208 = vmatprep.subr.mxu0 0.0
    %209 = vmatpush1.msra.mxu0 %v182
    %210 = vmatprep.subr.mxu0 0.0
    %211 = vmatpush1.msra.mxu0 %v183
    %212 = vmatprep.subr.mxu0 0.0
    %213 = vmatpush1.msra.mxu0 %v184
    %214 = vmatprep.subr.mxu0 0.0
    %215 = vmatpush1.msra.mxu0 %v185
    %216 = vmatprep.subr.mxu0 0.0
    %217 = vmatpush1.msra.mxu0 %v186
    %218 = vmatprep.subr.mxu0 0.0
    %219 = vmatpush1.msra.mxu0 %v187
    %220 = vmatprep.subr.mxu0 0.0
    %221 = vmatpush1.msra.mxu0 %v188
    %222 = vmatprep.subr.mxu0 0.0
    %223 = vmatpush1.msra.mxu0 %v189
    %224 = vmatprep.subr.mxu0 0.0
    %225 = vmatpush1.msra.mxu0 %v190
    %226 = vmatprep.subr.mxu0 0.0
    %227 = vmatpush1.msra.mxu0 %v191
    %228 = vmatprep.subr.mxu0 0.0
    %229 = vmatpush1.msra.mxu0 %v192
    %230 = vmatprep.subr.mxu0 0.0
    %231 = vmatpush1.msra.mxu0 %v193
    %232 = vmatprep.subr.mxu0 0.0
    %233 = vmatpush1.msra.mxu0 %v194
    %234 = vmatprep.subr.mxu0 0.0
    %235 = vmatpush1.msra.mxu0 0.0
    %236 = vmatprep.subr.mxu0 0.0
    %237 = vmatpush1.msra.mxu0 0.0
    %238 = vmatprep.subr.mxu0 0.0
    %239 = vmatpush1.msra.mxu0 0.0
    %240 = vmatprep.subr.mxu0 0.0
    %241 = vmatpush1.msra.mxu0 0.0
    %242 = vmatprep.subr.mxu0 0.0
    %243 = vmatpush1.msra.mxu0 0.0
    %244 = vmatprep.subr.mxu0 0.0
    %245 = vmatpush1.msra.mxu0 0.0
    %246 = vmatprep.subr.mxu0 0.0
    %247 = vmatpush1.msra.mxu0 0.0
    %248 = vmatprep.subr.mxu0 0.0
    %249 = vmatpush1.msra.mxu0 0.0
    %250 = vmatprep.subr.mxu0 0.0
    %251 = vmatpush1.msra.mxu0 0.0
    %252 = vmatprep.subr.mxu0 0.0
    %253 = vmatpush1.msra.mxu0 0.0
    %254 = vmatprep.subr.mxu0 0.0
    %255 = vmatpush1.msra.mxu0 0.0
    %256 = vmatprep.subr.mxu0 0.0
    %257 = vmatpush1.msra.mxu0 0.0
    %258 = vmatprep.subr.mxu0 0.0
    %259 = vmatpush1.msra.mxu0 0.0
    %260 = vmatprep.subr.mxu0 0.0
    %261 = vmatpush1.msra.mxu0 0.0
    %262 = vmatprep.subr.mxu0 0.0
    %263 = vmatpush1.msra.mxu0 0.0
    %264 = vmatprep.subr.mxu0 0.0
    %265 = vmatpush1.msra.mxu0 0.0
    %266 = vmatprep.mubr.f32.mxu0 0.0
    %267 = vmatmul.mubr.f32.gmra.mrb[0].mxu0 %v177
    %v268 = vpop.f32.mrb[0].mxu0
    %v269 = vadd.f32 %v200, %v268
    %v270 = vpop.f32.mrb[0].mxu0
    %271 = vmatprep.mubr.f32.mxu0 0.0
    %272 = vmatmul.mubr.f32.gmra.mrb[0].mxu0 %v178
    %v273 = vpop.f32.mrb[0].mxu0
    %v274 = vadd.f32 %v200, %v273
    %v275 = vpop.f32.mrb[0].mxu0
    %276 = vdwg.mxu0
    %v277 = vmax.f32 %v269, 0.0
    %v278 = vmax.f32 %v274, 0.0
    %v279 = vld [vmem:[#allocation8] sm:$0xff]
    %v280 = vld [vmem:[#allocation8 + $0x8] sm:$0xff]
    %v281 = vld [vmem:[#allocation8 + $0x10] sm:$0xff]
    %v282 = vld [vmem:[#allocation8 + $0x18] sm:$0xff]
    %v283 = vld [vmem:[#allocation8 + $0x20] sm:$0xff]
    %v284 = vld [vmem:[#allocation8 + $0x28] sm:$0xff]
    %v285 = vld [vmem:[#allocation8 + $0x30] sm:$0xff]
    %v286 = vld [vmem:[#allocation8 + $0x38] sm:$0xff]
    %v287 = vld [vmem:[#allocation8 + $0x40] sm:$0xff]
    %v288 = vld [vmem:[#allocation8 + $0x48] sm:$0xff]
    %v289 = vld [vmem:[#allocation8 + $0x50] sm:$0xff]
    %v290 = vld [vmem:[#allocation8 + $0x58] sm:$0xff]
    %v291 = vld [vmem:[#allocation8 + $0x60] sm:$0xff]
    %v292 = vld [vmem:[#allocation8 + $0x68] sm:$0xff]
    %v293 = vld [vmem:[#allocation8 + $0x70] sm:$0xff]
    %v294 = vld [vmem:[#allocation8 + $0x78] sm:$0xff]
    %v295 = vld [vmem:[%s6] sm:$0x1]
    %v297 = vlaneseq
    %v298 = vshrl.u32 %v297, 7
    %v299 = vsub.s32 0, %v298
    %v300 = vrot.slane %v295, %v299
    %302 = vmatprep.subr.mxu0 0.0
    %303 = vmatpush1.msra.mxu0 %v279
    %304 = vmatprep.subr.mxu0 0.0
    %305 = vmatpush1.msra.mxu0 %v280
    %306 = vmatprep.subr.mxu0 0.0
    %307 = vmatpush1.msra.mxu0 %v281
    %308 = vmatprep.subr.mxu0 0.0
    %309 = vmatpush1.msra.mxu0 %v282
    %310 = vmatprep.subr.mxu0 0.0
    %311 = vmatpush1.msra.mxu0 %v283
    %312 = vmatprep.subr.mxu0 0.0
    %313 = vmatpush1.msra.mxu0 %v284
    %314 = vmatprep.subr.mxu0 0.0
    %315 = vmatpush1.msra.mxu0 %v285
    %316 = vmatprep.subr.mxu0 0.0
    %317 = vmatpush1.msra.mxu0 %v286
    %318 = vmatprep.subr.mxu0 0.0
    %319 = vmatpush1.msra.mxu0 %v287
    %320 = vmatprep.subr.mxu0 0.0
    %321 = vmatpush1.msra.mxu0 %v288
    %322 = vmatprep.subr.mxu0 0.0
    %323 = vmatpush1.msra.mxu0 %v289
    %324 = vmatprep.subr.mxu0 0.0
    %325 = vmatpush1.msra.mxu0 %v290
    %326 = vmatprep.subr.mxu0 0.0
    %327 = vmatpush1.msra.mxu0 %v291
    %328 = vmatprep.subr.mxu0 0.0
    %329 = vmatpush1.msra.mxu0 %v292
    %330 = vmatprep.subr.mxu0 0.0
    %331 = vmatpush1.msra.mxu0 %v293
    %332 = vmatprep.subr.mxu0 0.0
    %333 = vmatpush1.msra.mxu0 %v294
    %334 = vmatprep.subr.mxu0 0.0
    %335 = vmatpush1.msra.mxu0 0.0
    %336 = vmatprep.subr.mxu0 0.0
    %337 = vmatpush1.msra.mxu0 0.0
    %338 = vmatprep.subr.mxu0 0.0
    %339 = vmatpush1.msra.mxu0 0.0
    %340 = vmatprep.subr.mxu0 0.0
    %341 = vmatpush1.msra.mxu0 0.0
    %342 = vmatprep.subr.mxu0 0.0
    %343 = vmatpush1.msra.mxu0 0.0
    %344 = vmatprep.subr.mxu0 0.0
    %345 = vmatpush1.msra.mxu0 0.0
    %346 = vmatprep.subr.mxu0 0.0
    %347 = vmatpush1.msra.mxu0 0.0
    %348 = vmatprep.subr.mxu0 0.0
    %349 = vmatpush1.msra.mxu0 0.0
    %350 = vmatprep.subr.mxu0 0.0
    %351 = vmatpush1.msra.mxu0 0.0
    %352 = vmatprep.subr.mxu0 0.0
    %353 = vmatpush1.msra.mxu0 0.0
    %354 = vmatprep.subr.mxu0 0.0
    %355 = vmatpush1.msra.mxu0 0.0
    %356 = vmatprep.subr.mxu0 0.0
    %357 = vmatpush1.msra.mxu0 0.0
    %358 = vmatprep.subr.mxu0 0.0
    %359 = vmatpush1.msra.mxu0 0.0
    %360 = vmatprep.subr.mxu0 0.0
    %361 = vmatpush1.msra.mxu0 0.0
    %362 = vmatprep.subr.mxu0 0.0
    %363 = vmatpush1.msra.mxu0 0.0
    %364 = vmatprep.subr.mxu0 0.0
    %365 = vmatpush1.msra.mxu0 0.0
    %366 = vmatprep.mubr.f32.mxu0 0.0
    %367 = vmatmul.mubr.f32.gmra.mrb[0].mxu0 %v277
    %v368 = vpop.f32.mrb[0].mxu0
    %v369 = vadd.f32 %v300, %v368
    %v370 = vpop.f32.mrb[0].mxu0
    %371 = vmatprep.mubr.f32.mxu0 0.0
    %372 = vmatmul.mubr.f32.gmra.mrb[0].mxu0 %v278
    %v373 = vpop.f32.mrb[0].mxu0
    %v374 = vadd.f32 %v300, %v373
    %v375 = vpop.f32.mrb[0].mxu0
    %376 = vdwg.mxu0
    %377 = vst [vmem:[#allocation10] sm:$0xff] %v369
    %378 = vst [vmem:[#allocation10 + $0x8] sm:$0xff] %v374
    // Predicated region
    $region46: #{tpu_custom_call.1} parent=1 // pred_check
      _
    $region47: #{tpu_custom_call.1} parent=1 // pred_check_branch
      %380 = sbr.rel (0) target = $region49
    $region48: #{tpu_custom_call.1} parent=1 // pred_region
      %s382 = ssub.s32 256, 256
      %383 = vsyncadd [#allocation4], %s382
      %s384 = sshll.u32 [#allocation10], 4
      %s385 = int_to_ptr.vmem [resolvable:$true] %s384
      %390 = dma.vmem_to_hbm [thread:$0]  %s385, 256, %s7, [#allocation4], 128, 128, 8
    $region49: #{tpu_custom_call.1} parent=1 // pred_fallthru
      _
    // Predicated region
    $region50: #{tpu_custom_call.1} parent=1 // pred_check
      _
    $region51: #{tpu_custom_call.1} parent=1 // pred_check_branch
      %392 = sbr.rel (0) target = $region53
    $region52: #{tpu_custom_call.1} parent=1 // pred_region
      %393 = dma.done [#allocation4], 256
    $region53: #{tpu_custom_call.1} parent=1 // pred_fallthru
      _
    %394 = vsyncpa [#allocation3], 1
    %395 = vsyncpa [#allocation6], 1
    %396 = vsyncpa [#allocation9], 1
    %397 = vsyncpa [#allocation4], 1

</llo_original>
